<compile_context>
chip_gen: v6e
topology: v6e:2x2x1
jax: 0.10.0
libtpu: 0.0.40
codegen_flags: <defaults>
</compile_context>

<pallas_src>
import functools

import jax
import jax.numpy as jnp
from jax.experimental import pallas as pl
from jax.experimental.pallas import tpu as pltpu


def _round_up(x: int, m: int) -> int:
    return (x + m - 1) // m * m


def _hinge_inverted_kernel(x_ref, t_ref, part_ref, *, margin, tile_rows):
    """One (tile_rows, 128) tile -> (1, 8, 128) partial hinge sum."""
    x = x_ref[...]                               # native dtype, (TB, 128)
    t = t_ref[...]                               # native dtype, (TB, 128)
    is_one = t == jnp.asarray(1, t.dtype)        # compare in native dtype
    xf = x.astype(jnp.float32)                   # widen in-register only
    # sign = -1 where target==1 else +1 ; margin - sign*x == one select, no mul
    hinge = jnp.maximum(jnp.where(is_one, margin + xf, margin - xf), 0.0)
    # Reduce the sublane tiles with pure VPU vreg adds (keeps XLU out of the
    # hot loop); result stays lane-dense (8, 128).
    part_ref[...] = jnp.sum(hinge.reshape(tile_rows // 8, 1, 8, 128), axis=0)


def hinge_inverted(input1, target, margin: float = 1.0, *, block_rows: int = 512):
    """Pallas implementation of hinge_inverted.forward.

    input1: (B, C) float array
    target: (C, B) array (shape of input1.T, as the reference multiplies
            target_mod elementwise with input1.t()); entries compared to 1
    returns: scalar float32 mean hinge loss
    """
    assert input1.ndim == 2, "input1 must be 2-D (the reference transposes it)"
    x_t = input1.T                               # pair elementwise with target
    assert x_t.shape == target.shape, (x_t.shape, target.shape)

    n = x_t.size
    rows = (n + 127) // 128                      # lane-dense row count
    tile_rows = _round_up(min(int(block_rows), _round_up(rows, 8)), 8)
    padded_rows = _round_up(rows, tile_rows)
    padded_n = padded_rows * 128
    num_tiles = padded_rows // tile_rows

    # Hinge-neutral padding: target pad != 1 -> sign = +1; input pad >= margin
    # -> clamp(margin - pad, 0) == 0, so padded elements contribute nothing.
    x_flat = jnp.pad(x_t.reshape(-1), (0, padded_n - n),
                     constant_values=float(margin) + 1.0)
    t_flat = jnp.pad(target.reshape(-1), (0, padded_n - n), constant_values=0)

    x2d = x_flat.reshape(padded_rows, 128)
    t2d = t_flat.reshape(padded_rows, 128)

    kernel = functools.partial(
        _hinge_inverted_kernel, margin=float(margin), tile_rows=tile_rows
    )

    partials = pl.pallas_call(
        kernel,
        out_shape=jax.ShapeDtypeStruct((num_tiles, 8, 128), jnp.float32),
        grid=(num_tiles,),
        in_specs=[
            # TODO(synk): sweep pipeline_mode=pl.Buffered(3) on large shapes.
            pl.BlockSpec((tile_rows, 128), lambda i: (i, 0)),
            pl.BlockSpec((tile_rows, 128), lambda i: (i, 0)),
        ],
        out_specs=pl.BlockSpec((1, 8, 128), lambda i: (i, 0, 0)),
        compiler_params=pltpu.CompilerParams(
            dimension_semantics=("parallel",)),
    )(x2d, t2d)

    # Tiny epilogue: single cross-lane reduce + divide by the ORIGINAL count.
    return jnp.sum(partials) / jnp.float32(n)


def _reference(input1, target, margin):
    target_mod = jnp.where(target == 1.0, -1.0, 1.0).astype(jnp.float32)
    return jnp.mean(jnp.maximum(-target_mod * input1.T + margin, 0.0))


if __name__ == "__main__":
    key = jax.random.PRNGKey(0)
    k1, k2 = jax.random.split(key)

    batch, num_classes = 8, 16
    margin = 1.0

    input1 = jax.random.normal(k1, (batch, num_classes), dtype=jnp.float32)
    # target has the shape of input1.t(); entries are 1.0 ("positive") or 0.0
    # ("negative") since the module tests target == 1.0.
    target = (jax.random.uniform(k2, (num_classes, batch)) < 0.5).astype(jnp.float32)

    loss = hinge_inverted(input1, target, margin=margin)
    loss = jax.block_until_ready(loss)

    ref = _reference(input1, target, margin)
    assert jnp.allclose(loss, ref, atol=1e-5, rtol=1e-5), (loss, ref)

    print("KERNEL_OK")
</pallas_src>

<mosaic_0001>
module attributes {stable_mosaic.version = 11 : i64} {
  func.func @_hinge_inverted_kernel(%arg0: i32, %arg1: memref<8x128xf32, #tpu.memory_space<vmem>>, %arg2: memref<8x128xf32, #tpu.memory_space<vmem>>, %arg3: memref<1x8x128xf32, #tpu.memory_space<vmem>>) attributes {dimension_semantics = [#tpu.dimension_semantics<parallel>], iteration_bounds = array<i64: 1>, scalar_prefetch = 0 : i64, scratch_operands = 0 : i64, tpu.core_type = #tpu.core_type<tc>, window_params = [{transform_indices = @transform_0, window_bounds = array<i64: 8, 128>}, {transform_indices = @transform_1, window_bounds = array<i64: 8, 128>}, {transform_indices = @transform_2, window_bounds = array<i64: 1, 8, 128>}]} {
    %c0 = arith.constant 0 : index
    %c0_0 = arith.constant 0 : index
    %0 = vector.load %arg1[%c0, %c0_0] : memref<8x128xf32, #tpu.memory_space<vmem>>, vector<8x128xf32>
    %c0_1 = arith.constant 0 : index
    %c0_2 = arith.constant 0 : index
    %1 = vector.load %arg2[%c0_1, %c0_2] : memref<8x128xf32, #tpu.memory_space<vmem>>, vector<8x128xf32>
    %cst = arith.constant 1.000000e+00 : f32
    %2 = vector.broadcast %cst : f32 to vector<8x128xf32>
    %3 = arith.cmpf oeq, %1, %2 : vector<8x128xf32>
    %cst_3 = arith.constant 1.000000e+00 : f32
    %4 = vector.broadcast %cst_3 : f32 to vector<8x128xf32>
    %5 = arith.addf %4, %0 : vector<8x128xf32>
    %cst_4 = arith.constant 1.000000e+00 : f32
    %6 = vector.broadcast %cst_4 : f32 to vector<8x128xf32>
    %7 = arith.subf %6, %0 : vector<8x128xf32>
    %8 = arith.select %3, %5, %7 : vector<8x128xi1>, vector<8x128xf32>
    %cst_5 = arith.constant 0.000000e+00 : f32
    %9 = vector.broadcast %cst_5 : f32 to vector<8x128xf32>
    %10 = arith.maximumf %8, %9 : vector<8x128xf32>
    %11 = vector.shape_cast %10 : vector<8x128xf32> to vector<1x1x8x128xf32>
    %cst_6 = arith.constant dense<0.000000e+00> : vector<1x8x128xf32>
    %12 = vector.multi_reduction <add>, %11, %cst_6 [0] : vector<1x1x8x128xf32> to vector<1x8x128xf32>
    %c0_7 = arith.constant 0 : index
    %c0_8 = arith.constant 0 : index
    %c0_9 = arith.constant 0 : index
    %13 = vector.load %arg3[%c0_7, %c0_8, %c0_9] : memref<1x8x128xf32, #tpu.memory_space<vmem>>, vector<1x8x128xf32>
    tpu.vector_store %arg3[%c0_7, %c0_8, %c0_9], %12 {strides = array<i32>} : memref<1x8x128xf32, #tpu.memory_space<vmem>>, vector<1x8x128xf32>,
    return
  }
  func.func @transform_0(%arg0: i32) -> (i32, i32) {
    %c0_i32 = arith.constant 0 : i32
    %c0_i32_0 = arith.constant 0 : i32
    return %arg0, %c0_i32 : i32, i32
  }
  func.func @transform_1(%arg0: i32) -> (i32, i32) {
    %c0_i32 = arith.constant 0 : i32
    %c0_i32_0 = arith.constant 0 : i32
    return %arg0, %c0_i32 : i32, i32
  }
  func.func @transform_2(%arg0: i32) -> (i32, i32, i32) {
    %c0_i32 = arith.constant 0 : i32
    %c0_i32_0 = arith.constant 0 : i32
    %c0_i32_1 = arith.constant 0 : i32
    return %arg0, %c0_i32, %c0_i32_0 : i32, i32, i32
  }
}

</mosaic_0001>

<llo_original>
// kernel: tpu_custom_call.1
$region0: #{tpu_custom_call.1}
  #allocation0 [shape = 'u32[]', space=smem, size = 0x4, offset = 0x4, fixed_abs, tag = 'smem constant byte address 0x4 - core index']
  #allocation1 [shape = 'u32[144,128]{1,0:T(1,128)}', space=vmem, size = 0x12000, scoped, tag = 'internal scratch']
  %s0 = inlined_call_operand.hbm [shape: f32[8,128], index: 0, kind: input, shape index: {}]
  %s1 = inlined_call_operand.hbm [shape: f32[8,128], index: 1, kind: input, shape index: {}]
  %s2 = inlined_call_operand.hbm [shape: f32[1,8,128], index: 2, kind: output, shape index: {}]
  %s3 = sld [smem:[#allocation0]]
  $region26: #{tpu_custom_call.1} parent=0
    _
  %s5 = ssub.s32 1, %s3
  %s6 = scalar_select 0, %s5, %s3
  $region1: #{tpu_custom_call.1} parent=0
    #allocation2 [shape = 'u8[4096]{0}', space=vmem, size = 0x1000, scoped, tag = 'input window, operand 0, single buffered']
    #allocation3 [shape = 's32[1]{0}', space=sflag, size = 0x4, scoped, tag = 'scoped memory for tpu_custom_call.1']
    #allocation4 [shape = 's32[1]{0}', space=sflag, size = 0x4, scoped, tag = 'scoped memory for tpu_custom_call.1']
    #allocation5 [shape = 'u8[4096]{0}', space=vmem, size = 0x1000, scoped, tag = 'input window, operand 1, single buffered']
    #allocation6 [shape = 's32[1]{0}', space=sflag, size = 0x4, scoped, tag = 'scoped memory for tpu_custom_call.1']
    #allocation7 [shape = 'u8[4096]{0}', space=vmem, size = 0x1000, scoped, tag = 'output window, operand 0, single buffered']
    %7 = vsyncpa [#allocation3], 0
    %8 = vsyncpa [#allocation6], 0
    %9 = vsyncpa [#allocation4], 0
    // Predicated region
    $region2: #{tpu_custom_call.1} parent=1 // pred_check
      _
    $region3: #{tpu_custom_call.1} parent=1 // pred_check_branch
      %11 = sbr.rel (0) target = $region5
    $region4: #{tpu_custom_call.1} parent=1 // pred_region
      %s13 = ssub.s32 128, 128
      %14 = vsyncadd [#allocation3], %s13
      %s16 = sshll.u32 [#allocation2], 4
      %s17 = int_to_ptr.vmem [resolvable:$true] %s16
      %19 = dma.hbm_to_vmem [thread:$0]  %s0, 128, %s17, [#allocation3]
    $region5: #{tpu_custom_call.1} parent=1 // pred_fallthru
      _
    // Predicated region
    $region6: #{tpu_custom_call.1} parent=1 // pred_check
      _
    $region7: #{tpu_custom_call.1} parent=1 // pred_check_branch
      %21 = sbr.rel (0) target = $region9
    $region8: #{tpu_custom_call.1} parent=1 // pred_region
      %s23 = ssub.s32 128, 128
      %24 = vsyncadd [#allocation6], %s23
      %s26 = sshll.u32 [#allocation5], 4
      %s27 = int_to_ptr.vmem [resolvable:$true] %s26
      %29 = dma.hbm_to_vmem [thread:$0]  %s1, 128, %s27, [#allocation6]
    $region9: #{tpu_custom_call.1} parent=1 // pred_fallthru
      _
    // Predicated region
    $region10: #{tpu_custom_call.1} parent=1 // pred_check
      _
    $region11: #{tpu_custom_call.1} parent=1 // pred_check_branch
      %31 = sbr.rel (0) target = $region13
    $region12: #{tpu_custom_call.1} parent=1 // pred_region
      %32 = dma.done [#allocation3], 128
    $region13: #{tpu_custom_call.1} parent=1 // pred_fallthru
      _
    // Predicated region
    $region14: #{tpu_custom_call.1} parent=1 // pred_check
      _
    $region15: #{tpu_custom_call.1} parent=1 // pred_check_branch
      %34 = sbr.rel (0) target = $region17
    $region16: #{tpu_custom_call.1} parent=1 // pred_region
      %35 = dma.done [#allocation6], 128
    $region17: #{tpu_custom_call.1} parent=1 // pred_fallthru
      _
    %v36 = vld [vmem:[#allocation2] sm:$0xff]
    %v37 = vld [vmem:[#allocation5] sm:$0xff]
    %vm38 = vcmp.eq.f32.partialorder %v37, 1.0
    %v39 = vadd.f32 %v36, 1.0
    %v40 = vsub.f32 1.0, %v36
    %v41 = vsel %vm38, %v39, %v40
    %v42 = vmax.f32 %v41, 0.0
    %v43 = vadd.f32 %v42, 0.0
    %44 = vst [vmem:[#allocation7] sm:$0xff] %v43
    // Predicated region
    $region18: #{tpu_custom_call.1} parent=1 // pred_check
      _
    $region19: #{tpu_custom_call.1} parent=1 // pred_check_branch
      %46 = sbr.rel (0) target = $region21
    $region20: #{tpu_custom_call.1} parent=1 // pred_region
      %s48 = ssub.s32 128, 128
      %49 = vsyncadd [#allocation4], %s48
      %s51 = sshll.u32 [#allocation7], 4
      %s52 = int_to_ptr.vmem [resolvable:$true] %s51
      %54 = dma.vmem_to_hbm [thread:$0]  %s52, 128, %s2, [#allocation4]
    $region21: #{tpu_custom_call.1} parent=1 // pred_fallthru
      _
    // Predicated region
    $region22: #{tpu_custom_call.1} parent=1 // pred_check
      _
    $region23: #{tpu_custom_call.1} parent=1 // pred_check_branch
      %56 = sbr.rel (0) target = $region25
    $region24: #{tpu_custom_call.1} parent=1 // pred_region
      %57 = dma.done [#allocation4], 128
    $region25: #{tpu_custom_call.1} parent=1 // pred_fallthru
      _
    %58 = vsyncpa [#allocation3], 1
    %59 = vsyncpa [#allocation6], 1
    %60 = vsyncpa [#allocation4], 1

</llo_original>
